<compile_context>
chip_gen: v6e
topology: v6e:2x2x1
jax: 0.10.0
libtpu: 0.0.40
codegen_flags: <defaults>
</compile_context>

<pallas_src>
import math

import jax
import jax.numpy as jnp
from jax.experimental import pallas as pl
from jax.experimental.pallas import tpu as pltpu


_LANE = 128
# Grid-less (fully VMEM-resident) path is used up to this many ORIGINAL rows.
# Packed footprint is ~48 B/row f32  ->  ~6 MiB at the threshold, safe under
# every generation's scoped-VMEM default (v5e 16 MiB, v6e 32 MiB, v7x 32 MiB).
_SINGLE_BLOCK_MAX_B = 131072
# Original rows per grid step for the batch-tiled path: ~2 MiB of input per
# step so DMA time dominates per-grid-step pipeline overhead.  Double-buffered
# footprint ~6 MiB, well under the explicit 32 MiB limit (v7x-safe).
_BATCH_BLOCK_ROWS = 65536


# --------------------------------------------------------------------------
# Kernel: one fused matmul (MXU, f32 accumulation) + bias add, lane-dense.
# --------------------------------------------------------------------------
def _fused_linear_kernel(x_ref, w_ref, b_ref, o_ref):
    acc = jnp.dot(x_ref[...], w_ref[...], preferred_element_type=jnp.float32)
    o_ref[...] = (acc + b_ref[...]).astype(o_ref.dtype)


# --------------------------------------------------------------------------
# One-time parameter preparation (load time, NOT per forward call).
# --------------------------------------------------------------------------
def fuse_params(w1, b1, w2, b2):
    """Fuse Linear(in,8)->Linear(8,C) and expand to the packed-batch layout.

    w1: (8, in_dim) torch layout (out, in);  b1: (8,)
    w2: (C, 8);                              b2: (C,)
    Returns (w_packed (pack*in_dim, pack*C) f32,
             b_packed (1, pack*C) f32,
             n_classes, in_dim, pack).
    """
    w1 = jnp.asarray(w1, jnp.float32)
    b1 = jnp.asarray(b1, jnp.float32)
    w2 = jnp.asarray(w2, jnp.float32)
    b2 = jnp.asarray(b2, jnp.float32)

    n_classes = w2.shape[0]
    in_dim = w1.shape[1]

    # (x @ W1^T + b1) @ W2^T + b2 == x @ (W2 @ W1)^T + (b1 @ W2^T + b2)
    w_fused = (w2 @ w1).T            # (in_dim, C)
    b_fused = b1 @ w2.T + b2         # (C,)

    # Pack `pack` consecutive batch rows into one kernel row so the kernel
    # output width pack*C is a multiple of 128 lanes (lane-dense store) and
    # the kernel output is exactly the row-major layout of (B, C).
    pack = _LANE // math.gcd(_LANE, n_classes)              # lcm(128,C)/C
    w_packed = jnp.kron(jnp.eye(pack, dtype=jnp.float32), w_fused)  # block-diag
    b_packed = jnp.tile(b_fused, pack)[None, :]              # (1, pack*C)
    return w_packed, b_packed, n_classes, in_dim, pack


def _cost(rows, kp, cp, x_bytes, w_bytes, out_bytes):
    return pl.CostEstimate(
        flops=2 * rows * kp * cp,
        transcendentals=0,
        bytes_accessed=(x_bytes * rows * kp + w_bytes * kp * cp + 4 * cp
                        + out_bytes * rows * cp),
    )


# --------------------------------------------------------------------------
# Small/medium batch: grid-less, everything resident in VMEM.
# --------------------------------------------------------------------------
def _forward_single_block(xp, w, b, out_dtype):
    r, kp = xp.shape
    cp = w.shape[1]
    vmem = pl.BlockSpec(memory_space=pltpu.MemorySpace.VMEM)
    return pl.pallas_call(
        _fused_linear_kernel,
        out_shape=jax.ShapeDtypeStruct((r, cp), out_dtype),
        in_specs=[vmem, vmem, vmem],
        out_specs=vmem,
        compiler_params=pltpu.CompilerParams(vmem_limit_bytes=32 * 1024 * 1024),
        cost_estimate=_cost(r, kp, cp, xp.dtype.itemsize, w.dtype.itemsize,
                            jnp.dtype(out_dtype).itemsize),
    )(xp, w, b)


# --------------------------------------------------------------------------
# Large batch: tile over packed rows, parallel axis (megacore / v7x 2 TCs).
# Partial last block handled by Pallas masking (no padded copy of x).
# --------------------------------------------------------------------------
def _forward_batched(xp, w, b, out_dtype, block_rows):
    r, kp = xp.shape
    cp = w.shape[1]
    block_rows = ((max(8, block_rows) + 7) // 8) * 8          # sublane multiple
    block_rows = min(block_rows, ((r + 7) // 8) * 8)
    n_blocks = pl.cdiv(r, block_rows)
    return pl.pallas_call(
        _fused_linear_kernel,
        out_shape=jax.ShapeDtypeStruct((r, cp), out_dtype),
        grid=(n_blocks,),
        in_specs=[
            pl.BlockSpec((block_rows, kp), lambda i: (i, 0)),
            pl.BlockSpec((kp, cp), lambda i: (0, 0)),      # weight stays resident
            pl.BlockSpec((1, cp), lambda i: (0, 0)),       # bias stays resident
        ],
        out_specs=pl.BlockSpec((block_rows, cp), lambda i: (i, 0)),
        compiler_params=pltpu.CompilerParams(
            dimension_semantics=("parallel",),
            vmem_limit_bytes=32 * 1024 * 1024,   # v7x-safe (64 MiB physical)
        ),
        cost_estimate=_cost(r, kp, cp, xp.dtype.itemsize, w.dtype.itemsize,
                            jnp.dtype(out_dtype).itemsize),
    )(xp, w, b)


# --------------------------------------------------------------------------
# Forward pass (semantics of NLI_Reverse_Net_Exact.forward).
# --------------------------------------------------------------------------
def nli_reverse_net_exact(e_emb, fused_params,
                          single_block_max_b=_SINGLE_BLOCK_MAX_B,
                          batch_block_rows=_BATCH_BLOCK_ROWS):
    w_packed, b_packed, n_classes, in_dim, pack = fused_params

    x = jnp.asarray(e_emb)
    if x.dtype != jnp.float32 and x.dtype != jnp.bfloat16:
        x = x.astype(jnp.float32)
    out_dtype = x.dtype
    batch = x.shape[0]

    # bf16 activation path: cast the (tiny) packed weight to match; the MXU
    # accumulation stays f32 via preferred_element_type inside the kernel.
    w = w_packed if x.dtype == w_packed.dtype else w_packed.astype(x.dtype)

    # Pad at most (pack-1) rows so the packing reshape is a free, contiguous
    # reinterpretation; padded rows produce bias-only values and are dropped.
    b_rows = pack * ((batch + pack - 1) // pack)
    if b_rows != batch:
        x = jnp.pad(x, ((0, b_rows - batch), (0, 0)))
    xp = x.reshape(b_rows // pack, pack * in_dim)            # contiguous: free

    if batch <= single_block_max_b:
        out_p = _forward_single_block(xp, w, b_packed, out_dtype)
    else:
        out_p = _forward_batched(xp, w, b_packed, out_dtype,
                                 max(1, batch_block_rows // pack))

    out = out_p.reshape(b_rows, n_classes)                   # contiguous: free
    return out if b_rows == batch else out[:batch]


# --------------------------------------------------------------------------
# Deterministic torch.nn.Linear-style init (uniform +/- 1/sqrt(fan_in)).
# --------------------------------------------------------------------------
def _init_linear(key, out_features, in_features):
    kw, kb = jax.random.split(key)
    bound = 1.0 / jnp.sqrt(jnp.float32(in_features))
    w = jax.random.uniform(kw, (out_features, in_features), jnp.float32,
                           minval=-bound, maxval=bound)
    b = jax.random.uniform(kb, (out_features,), jnp.float32,
                           minval=-bound, maxval=bound)
    return w, b


if __name__ == "__main__":
    n_classes = 4
    nli_classes = 2
    in_dim = nli_classes * n_classes      # 8
    hidden = 8

    root = jax.random.PRNGKey(0)
    k_l1, k_l2, k_a, k_b, k_c, k_d = jax.random.split(root, 6)

    w1, b1 = _init_linear(k_l1, hidden, in_dim)       # Linear(2*n_classes, 8)
    w2, b2 = _init_linear(k_l2, n_classes, hidden)    # Linear(8, n_classes)

    # One-time parameter fusion + packed-layout expansion (load time only).
    fused = fuse_params(w1, b1, w2, b2)

    def ref_fn(x):
        x = x.astype(jnp.float32)
        return (x @ w1.T + b1) @ w2.T + b2

    # 1) Small batch -> grid-less VMEM-resident path.
    e1 = jax.random.normal(k_a, (8, in_dim), jnp.float32)
    o1 = jax.block_until_ready(nli_reverse_net_exact(e1, fused))
    assert o1.shape == (8, n_classes)
    assert jnp.allclose(o1, ref_fn(e1), atol=1e-5, rtol=1e-5)

    # 2) Batch not a multiple of the pack factor (exercise pad + tail slice).
    e2 = jax.random.normal(k_b, (37, in_dim), jnp.float32)
    o2 = jax.block_until_ready(nli_reverse_net_exact(e2, fused))
    assert o2.shape == (37, n_classes)
    assert jnp.allclose(o2, ref_fn(e2), atol=1e-5, rtol=1e-5)

    # 3) Force the batch-tiled parallel path at small shapes: multiple grid
    #    blocks plus a masked partial last block (defaults only switch >128K).
    e3 = jax.random.normal(k_c, (4130, in_dim), jnp.float32)
    o3 = jax.block_until_ready(
        nli_reverse_net_exact(e3, fused, single_block_max_b=0,
                              batch_block_rows=1024))
    assert o3.shape == (4130, n_classes)
    assert jnp.allclose(o3, ref_fn(e3), atol=1e-5, rtol=1e-5)

    # 4) bf16 activation path (f32 accumulation in-kernel).
    e4 = jax.random.normal(k_d, (64, in_dim), jnp.float32).astype(jnp.bfloat16)
    o4 = jax.block_until_ready(nli_reverse_net_exact(e4, fused))
    assert o4.shape == (64, n_classes) and o4.dtype == jnp.bfloat16
    assert jnp.allclose(o4.astype(jnp.float32), ref_fn(e4), atol=5e-2, rtol=5e-2)

    print("KERNEL_OK")
</pallas_src>

<mosaic_0001>
module attributes {stable_mosaic.version = 11 : i64} {
  func.func @_fused_linear_kernel(%arg0: memref<1x256xf32, #tpu.memory_space<vmem>>, %arg1: memref<256x128xf32, #tpu.memory_space<vmem>>, %arg2: memref<1x128xf32, #tpu.memory_space<vmem>>, %arg3: memref<1x128xf32, #tpu.memory_space<vmem>>) attributes {dimension_semantics = [], scalar_prefetch = 0 : i64, scratch_operands = 0 : i64, tpu.core_type = #tpu.core_type<tc>} {
    %c0 = arith.constant 0 : index
    %c0_0 = arith.constant 0 : index
    %0 = vector.load %arg0[%c0, %c0_0] : memref<1x256xf32, #tpu.memory_space<vmem>>, vector<1x256xf32>
    %c0_1 = arith.constant 0 : index
    %c0_2 = arith.constant 0 : index
    %1 = vector.load %arg1[%c0_1, %c0_2] : memref<256x128xf32, #tpu.memory_space<vmem>>, vector<256x128xf32>
    %cst = arith.constant dense<0.000000e+00> : vector<1x128xf32>
    %2 = tpu.matmul %0, %1, %cst {dimension_numbers = #tpu.dot_dimension_numbers<[1], [0], [0], [1], [0, 0, 1, 1], [], []>} : vector<1x256xf32>, vector<256x128xf32>, vector<1x128xf32> -> vector<1x128xf32>
    %c0_3 = arith.constant 0 : index
    %c0_4 = arith.constant 0 : index
    %3 = vector.load %arg2[%c0_3, %c0_4] : memref<1x128xf32, #tpu.memory_space<vmem>>, vector<1x128xf32>
    %4 = arith.addf %2, %3 : vector<1x128xf32>
    %c0_5 = arith.constant 0 : index
    %c0_6 = arith.constant 0 : index
    %5 = vector.load %arg3[%c0_5, %c0_6] : memref<1x128xf32, #tpu.memory_space<vmem>>, vector<1x128xf32>
    tpu.vector_store %arg3[%c0_5, %c0_6], %4 {strides = array<i32>} : memref<1x128xf32, #tpu.memory_space<vmem>>, vector<1x128xf32>,
    return
  }
}

</mosaic_0001>

<llo_original>
// kernel: tpu_custom_call.1
$region0: #{tpu_custom_call.1}
  #allocation0 [shape = 'u32[]', space=smem, size = 0x4, offset = 0x4, fixed_abs, tag = 'smem constant byte address 0x4 - core index']
  #allocation1 [shape = 'u32[144,128]{1,0:T(1,128)}', space=vmem, size = 0x12000, scoped, tag = 'internal scratch']
  %s0 = inlined_call_operand.hbm [shape: f32[1,256], index: 0, kind: input, shape index: {}]
  %s1 = inlined_call_operand.hbm [shape: f32[256,128], index: 1, kind: input, shape index: {}]
  %s2 = inlined_call_operand.vmem [shape: f32[1,128], index: 2, kind: input, shape index: {}]
  %s3 = inlined_call_operand.hbm [shape: f32[1,128], index: 3, kind: output, shape index: {}]
  %s4 = sld [smem:[#allocation0]]
  $region30: #{tpu_custom_call.1} parent=0
    _
  %s6 = ssub.s32 1, %s4
  %s7 = scalar_select 0, %s6, %s4
  $region1: #{tpu_custom_call.1} parent=0
    #allocation2 [shape = 'u8[1024]{0}', space=vmem, size = 0x400, scoped, tag = 'input window, operand 0, single buffered']
    #allocation3 [shape = 's32[1]{0}', space=sflag, size = 0x4, scoped, tag = 'scoped memory for tpu_custom_call.1']
    #allocation4 [shape = 's32[1]{0}', space=sflag, size = 0x4, scoped, tag = 'scoped memory for tpu_custom_call.1']
    #allocation5 [shape = 'u8[131072]{0}', space=vmem, size = 0x20000, scoped, tag = 'input window, operand 1, single buffered']
    #allocation6 [shape = 's32[1]{0}', space=sflag, size = 0x4, scoped, tag = 'scoped memory for tpu_custom_call.1']
    #allocation7 [shape = 'u8[512]{0}', space=vmem, size = 0x400, scoped, tag = 'output window, operand 0, single buffered']
    %8 = vsyncpa [#allocation3], 0
    %9 = vsyncpa [#allocation6], 0
    %10 = vsyncpa [#allocation4], 0
    // Predicated region
    $region2: #{tpu_custom_call.1} parent=1 // pred_check
      _
    $region3: #{tpu_custom_call.1} parent=1 // pred_check_branch
      %12 = sbr.rel (0) target = $region5
    $region4: #{tpu_custom_call.1} parent=1 // pred_region
      %s14 = ssub.s32 32, 32
      %15 = vsyncadd [#allocation3], %s14
      %s17 = sshll.u32 [#allocation2], 4
      %s18 = int_to_ptr.vmem [resolvable:$true] %s17
      %20 = dma.hbm_to_vmem [thread:$0]  %s0, 32, %s18, [#allocation3]
    $region5: #{tpu_custom_call.1} parent=1 // pred_fallthru
      _
    // Predicated region
    $region6: #{tpu_custom_call.1} parent=1 // pred_check
      _
    $region7: #{tpu_custom_call.1} parent=1 // pred_check_branch
      %22 = sbr.rel (0) target = $region9
    $region8: #{tpu_custom_call.1} parent=1 // pred_region
      %s24 = ssub.s32 4096, 4096
      %25 = vsyncadd [#allocation6], %s24
      %s26 = sshll.u32 [#allocation5], 4
      %s27 = int_to_ptr.vmem [resolvable:$true] %s26
      %32 = dma.hbm_to_vmem [thread:$0]  %s1, 4096, %s27, [#allocation6], 128, 128, 8
    $region9: #{tpu_custom_call.1} parent=1 // pred_fallthru
      _
    // Predicated region
    $region10: #{tpu_custom_call.1} parent=1 // pred_check
      _
    $region11: #{tpu_custom_call.1} parent=1 // pred_check_branch
      %34 = sbr.rel (0) target = $region13
    $region12: #{tpu_custom_call.1} parent=1 // pred_region
      _
    $region13: #{tpu_custom_call.1} parent=1 // pred_fallthru
      _
    // Predicated region
    $region14: #{tpu_custom_call.1} parent=1 // pred_check
      _
    $region15: #{tpu_custom_call.1} parent=1 // pred_check_branch
      %36 = sbr.rel (0) target = $region17
    $region16: #{tpu_custom_call.1} parent=1 // pred_region
      %37 = dma.done [#allocation3], 32
    $region17: #{tpu_custom_call.1} parent=1 // pred_fallthru
      _
    // Predicated region
    $region18: #{tpu_custom_call.1} parent=1 // pred_check
      _
    $region19: #{tpu_custom_call.1} parent=1 // pred_check_branch
      %39 = sbr.rel (0) target = $region21
    $region20: #{tpu_custom_call.1} parent=1 // pred_region
      %40 = dma.done [#allocation6], 4096
    $region21: #{tpu_custom_call.1} parent=1 // pred_fallthru
      _
    %v41 = vld [vmem:[#allocation2] sm:$0x3]
    %v42 = vld [vmem:[#allocation5] sm:$0xff]
    %v43 = vld [vmem:[#allocation5 + $0x8] sm:$0xff]
    %v44 = vld [vmem:[#allocation5 + $0x10] sm:$0xff]
    %v45 = vld [vmem:[#allocation5 + $0x18] sm:$0xff]
    %v46 = vld [vmem:[#allocation5 + $0x20] sm:$0xff]
    %v47 = vld [vmem:[#allocation5 + $0x28] sm:$0xff]
    %v48 = vld [vmem:[#allocation5 + $0x30] sm:$0xff]
    %v49 = vld [vmem:[#allocation5 + $0x38] sm:$0xff]
    %v50 = vld [vmem:[#allocation5 + $0x40] sm:$0xff]
    %v51 = vld [vmem:[#allocation5 + $0x48] sm:$0xff]
    %v52 = vld [vmem:[#allocation5 + $0x50] sm:$0xff]
    %v53 = vld [vmem:[#allocation5 + $0x58] sm:$0xff]
    %v54 = vld [vmem:[#allocation5 + $0x60] sm:$0xff]
    %v55 = vld [vmem:[#allocation5 + $0x68] sm:$0xff]
    %v56 = vld [vmem:[#allocation5 + $0x70] sm:$0xff]
    %v57 = vld [vmem:[#allocation5 + $0x78] sm:$0xff]
    %v58 = vld [vmem:[#allocation5 + $0x80] sm:$0xff]
    %v59 = vld [vmem:[#allocation5 + $0x88] sm:$0xff]
    %v60 = vld [vmem:[#allocation5 + $0x90] sm:$0xff]
    %v61 = vld [vmem:[#allocation5 + $0x98] sm:$0xff]
    %v62 = vld [vmem:[#allocation5 + $0xa0] sm:$0xff]
    %v63 = vld [vmem:[#allocation5 + $0xa8] sm:$0xff]
    %v64 = vld [vmem:[#allocation5 + $0xb0] sm:$0xff]
    %v65 = vld [vmem:[#allocation5 + $0xb8] sm:$0xff]
    %v66 = vld [vmem:[#allocation5 + $0xc0] sm:$0xff]
    %v67 = vld [vmem:[#allocation5 + $0xc8] sm:$0xff]
    %v68 = vld [vmem:[#allocation5 + $0xd0] sm:$0xff]
    %v69 = vld [vmem:[#allocation5 + $0xd8] sm:$0xff]
    %v70 = vld [vmem:[#allocation5 + $0xe0] sm:$0xff]
    %v71 = vld [vmem:[#allocation5 + $0xe8] sm:$0xff]
    %v72 = vld [vmem:[#allocation5 + $0xf0] sm:$0xff]
    %v73 = vld [vmem:[#allocation5 + $0xf8] sm:$0xff]
    %v74 = vld [vmem:[%s2] sm:$0x1]
    %v76 = vlaneseq
    %v77 = vshrl.u32 %v76, 7
    %v78 = vsub.s32 0, %v77
    %v79 = vrot.slane %v41, %v78
    %v80 = vlaneseq
    %v81 = vshrl.u32 %v80, 7
    %v82 = vsub.s32 1, %v81
    %v83 = vrot.slane %v41, %v82
    %86 = vmatprep.subr.mxu0 0.0
    %87 = vmatpush1.msra.mxu0 %v57
    %88 = vmatprep.subr.mxu0 0.0
    %89 = vmatpush1.msra.mxu0 %v56
    %90 = vmatprep.subr.mxu0 0.0
    %91 = vmatpush1.msra.mxu0 %v55
    %92 = vmatprep.subr.mxu0 0.0
    %93 = vmatpush1.msra.mxu0 %v54
    %94 = vmatprep.subr.mxu0 0.0
    %95 = vmatpush1.msra.mxu0 %v53
    %96 = vmatprep.subr.mxu0 0.0
    %97 = vmatpush1.msra.mxu0 %v52
    %98 = vmatprep.subr.mxu0 0.0
    %99 = vmatpush1.msra.mxu0 %v51
    %100 = vmatprep.subr.mxu0 0.0
    %101 = vmatpush1.msra.mxu0 %v50
    %102 = vmatprep.subr.mxu0 0.0
    %103 = vmatpush1.msra.mxu0 %v49
    %104 = vmatprep.subr.mxu0 0.0
    %105 = vmatpush1.msra.mxu0 %v48
    %106 = vmatprep.subr.mxu0 0.0
    %107 = vmatpush1.msra.mxu0 %v47
    %108 = vmatprep.subr.mxu0 0.0
    %109 = vmatpush1.msra.mxu0 %v46
    %110 = vmatprep.subr.mxu0 0.0
    %111 = vmatpush1.msra.mxu0 %v45
    %112 = vmatprep.subr.mxu0 0.0
    %113 = vmatpush1.msra.mxu0 %v44
    %114 = vmatprep.subr.mxu0 0.0
    %115 = vmatpush1.msra.mxu0 %v43
    %116 = vmatprep.subr.mxu0 0.0
    %117 = vmatpush1.msra.mxu0 %v42
    %118 = vmatprep.subr.mxu0 0.0
    %119 = vmatpush2.msra.mxu0 %v73
    %120 = vmatprep.subr.mxu0 0.0
    %121 = vmatpush2.msra.mxu0 %v72
    %122 = vmatprep.subr.mxu0 0.0
    %123 = vmatpush2.msra.mxu0 %v71
    %124 = vmatprep.subr.mxu0 0.0
    %125 = vmatpush2.msra.mxu0 %v70
    %126 = vmatprep.subr.mxu0 0.0
    %127 = vmatpush2.msra.mxu0 %v69
    %128 = vmatprep.subr.mxu0 0.0
    %129 = vmatpush2.msra.mxu0 %v68
    %130 = vmatprep.subr.mxu0 0.0
    %131 = vmatpush2.msra.mxu0 %v67
    %132 = vmatprep.subr.mxu0 0.0
    %133 = vmatpush2.msra.mxu0 %v66
    %134 = vmatprep.subr.mxu0 0.0
    %135 = vmatpush2.msra.mxu0 %v65
    %136 = vmatprep.subr.mxu0 0.0
    %137 = vmatpush2.msra.mxu0 %v64
    %138 = vmatprep.subr.mxu0 0.0
    %139 = vmatpush2.msra.mxu0 %v63
    %140 = vmatprep.subr.mxu0 0.0
    %141 = vmatpush2.msra.mxu0 %v62
    %142 = vmatprep.subr.mxu0 0.0
    %143 = vmatpush2.msra.mxu0 %v61
    %144 = vmatprep.subr.mxu0 0.0
    %145 = vmatpush2.msra.mxu0 %v60
    %146 = vmatprep.subr.mxu0 0.0
    %147 = vmatpush2.msra.mxu0 %v59
    %148 = vmatprep.subr.mxu0 0.0
    %149 = vmatpush2.msra.mxu0 %v58
    %150 = vmatprep.mubr.f32.mxu0 %v83
    %151 = vmatmul.mubr.f32.gmra.mxu0 %v79
    %v152 = vpop.f32.mrf.mxu0
    %v153 = vadd.f32 %v74, %v152
    %v154 = vpop.f32.mrf.mxu0
    %155 = vdwg.mxu0
    %156 = vst [vmem:[#allocation7] sm:$0x1] %v153
    // Predicated region
    $region22: #{tpu_custom_call.1} parent=1 // pred_check
      _
    $region23: #{tpu_custom_call.1} parent=1 // pred_check_branch
      %158 = sbr.rel (0) target = $region25
    $region24: #{tpu_custom_call.1} parent=1 // pred_region
      %s160 = ssub.s32 16, 16
      %161 = vsyncadd [#allocation4], %s160
      %s163 = sshll.u32 [#allocation7], 4
      %s164 = int_to_ptr.vmem [resolvable:$true] %s163
      %166 = dma.vmem_to_hbm [thread:$0]  %s164, 16, %s3, [#allocation4]
    $region25: #{tpu_custom_call.1} parent=1 // pred_fallthru
      _
    // Predicated region
    $region26: #{tpu_custom_call.1} parent=1 // pred_check
      _
    $region27: #{tpu_custom_call.1} parent=1 // pred_check_branch
      %168 = sbr.rel (0) target = $region29
    $region28: #{tpu_custom_call.1} parent=1 // pred_region
      %169 = dma.done [#allocation4], 16
    $region29: #{tpu_custom_call.1} parent=1 // pred_fallthru
      _
    %170 = vsyncpa [#allocation3], 1
    %171 = vsyncpa [#allocation6], 1
    %172 = vsyncpa [#allocation4], 1

</llo_original>
